<compile_context>
chip_gen: v5e
topology: v5e:2x2
jax: 0.10.0
libtpu: 0.0.40
codegen_flags: <defaults>
</compile_context>

<pallas_src>
import functools

import numpy as np
import jax
import jax.numpy as jnp
from jax.experimental import pallas as pl
from jax.experimental.pallas import tpu as pltpu

DEFAULT_TILE_B = 512


def _round_up(x, m):
    return (x + m - 1) // m * m


# ---------------------------------------------------------------- kernel -----
def _qfunction_kernel(obs_ref, act_ref, w1o_ref, w1a_ref, b1_ref,
                      w2_ref, b2_ref, w3_ref, b3_ref, o_ref):
    # Layer 1: cat([obs, action], -1) @ w1 == obs @ w1[:obs_dim] + act @ w1[obs_dim:]
    h = jnp.dot(obs_ref[...], w1o_ref[...], preferred_element_type=jnp.float32)
    h = h + jnp.dot(act_ref[...], w1a_ref[...], preferred_element_type=jnp.float32)
    h = jnp.maximum(h + b1_ref[...], 0.0)

    # Layer 2
    h = jnp.dot(h, w2_ref[...], preferred_element_type=jnp.float32) + b2_ref[...]
    h = jnp.maximum(h, 0.0)

    # Layer 3 (head): true (tile_b, 1) output block -> 4 B/row HBM writeback.
    o_ref[...] = jnp.dot(h, w3_ref[...],
                         preferred_element_type=jnp.float32) + b3_ref[...]


# ------------------------------------------------------------------ glue -----
@functools.partial(jax.jit, static_argnames=("tile_b",))
def qfunction_forward(obs, action, params, tile_b=DEFAULT_TILE_B):
    B, obs_dim = obs.shape
    act_dim = action.shape[1]
    H = params["w2"].shape[0]

    # Pick a row tile: at most `tile_b`, at least 8 (sublane granularity); pad
    # the batch up to a tile multiple so every block is full (zero rows are
    # numerically harmless and sliced off below).
    tb = min(tile_b, _round_up(B, 8))
    Bp = _round_up(B, tb)
    if Bp != B:
        obs = jnp.pad(obs, ((0, Bp - B), (0, 0)))
        action = jnp.pad(action, ((0, Bp - B), (0, 0)))

    row_spec = lambda d: pl.BlockSpec((tb, d), lambda i: (i, 0))
    resident = lambda s: pl.BlockSpec(s, lambda i: (0, 0))   # stays in VMEM

    out = pl.pallas_call(
        _qfunction_kernel,
        out_shape=jax.ShapeDtypeStruct((Bp, 1), jnp.float32),
        grid_spec=pltpu.PrefetchScalarGridSpec(
            num_scalar_prefetch=0,
            grid=(Bp // tb,),
            in_specs=[
                row_spec(obs_dim),            # obs rows
                row_spec(act_dim),            # action rows
                resident((obs_dim, H)),       # w1_obs
                resident((act_dim, H)),       # w1_act
                resident((1, H)),             # b1
                resident((H, H)),             # w2
                resident((1, H)),             # b2
                resident((H, 1)),             # w3
                resident((1, 1)),             # b3
            ],
            out_specs=row_spec(1),
        ),
        compiler_params=pltpu.CompilerParams(
            dimension_semantics=("parallel",)),   # v7x: shard rows over 2 TCs
    )(obs, action,
      params["w1_obs"], params["w1_act"], params["b1"],
      params["w2"], params["b2"], params["w3"], params["b3"])

    return out[:B]                                 # q: [B, 1], matches torch


# ------------------------------------------------------------- parameters ----
def init_params(key, obs_dim, action_dim, hidden_dim):
    """Weights stored pre-split / pre-reshaped so the forward pass needs no
    per-call XLA concat, reshape, pad or slice ops on the parameters."""
    k1, k2, k3 = jax.random.split(key, 3)

    def rnorm(kk, shape, scale):
        return scale * jax.random.normal(kk, shape, dtype=jnp.float32)

    in_dim = obs_dim + action_dim
    w1 = rnorm(k1, (in_dim, hidden_dim), 1.0 / np.sqrt(in_dim))
    w2 = rnorm(k2, (hidden_dim, hidden_dim), 1.0 / np.sqrt(hidden_dim))
    w3 = rnorm(k3, (hidden_dim, 1), 1.0 / np.sqrt(hidden_dim))
    b1 = jnp.zeros((1, hidden_dim), jnp.float32)
    b2 = jnp.zeros((1, hidden_dim), jnp.float32)
    b3 = jnp.zeros((1, 1), jnp.float32)

    return dict(
        # kernel parameters (w1 split so cat([obs, action]) never materializes)
        w1_obs=w1[:obs_dim], w1_act=w1[obs_dim:], b1=b1,
        w2=w2, b2=b2, w3=w3, b3=b3,
        # original w1 kept only for the pure-JAX reference check
        w1=w1)


def _reference_forward(obs, action, params):
    hp = jax.lax.Precision.HIGHEST      # force f32 matmuls in the reference
    x = jnp.concatenate([obs, action], axis=1)
    h = jnp.maximum(jnp.dot(x, params["w1"], precision=hp) + params["b1"], 0.0)
    h = jnp.maximum(jnp.dot(h, params["w2"], precision=hp) + params["b2"], 0.0)
    return jnp.dot(h, params["w3"], precision=hp) + params["b3"]


# ------------------------------------------------------------------- main ----
if __name__ == "__main__":
    key = jax.random.PRNGKey(0)
    kp, ko, ka, ko2, ka2 = jax.random.split(key, 5)

    obs_dim, action_dim, hidden_dim = 32, 4, 32
    params = init_params(kp, obs_dim, action_dim, hidden_dim)

    # Small shape consistent with the module (batch=2).
    B = 2
    obs = jax.random.normal(ko, (B, obs_dim), dtype=jnp.float32)
    action = jax.random.uniform(ka, (B, action_dim), jnp.float32, -1.0, 1.0)

    q = qfunction_forward(obs, action, params)
    jax.block_until_ready(q)
    q_ref = _reference_forward(obs, action, params)
    assert q.shape == (B, 1)
    assert bool(jnp.all(jnp.isfinite(q)))
    np.testing.assert_allclose(np.asarray(q), np.asarray(q_ref),
                               rtol=1e-5, atol=1e-5)

    # Exercise the multi-step grid + ragged-batch padding path (B=1000 -> two
    # 512-row tiles, last one padded).
    B2 = 1000
    obs2 = jax.random.normal(ko2, (B2, obs_dim), dtype=jnp.float32)
    action2 = jax.random.uniform(ka2, (B2, action_dim), jnp.float32, -1.0, 1.0)
    q2 = qfunction_forward(obs2, action2, params)
    jax.block_until_ready(q2)
    q2_ref = _reference_forward(obs2, action2, params)
    assert q2.shape == (B2, 1)
    np.testing.assert_allclose(np.asarray(q2), np.asarray(q2_ref),
                               rtol=1e-5, atol=1e-5)

    print("KERNEL_OK")
</pallas_src>

<mosaic_0001>
module attributes {stable_mosaic.version = 11 : i64} {
  func.func @_qfunction_kernel(%arg0: i32, %arg1: memref<8x32xf32, #tpu.memory_space<vmem>>, %arg2: memref<8x4xf32, #tpu.memory_space<vmem>>, %arg3: memref<32x32xf32, #tpu.memory_space<vmem>>, %arg4: memref<4x32xf32, #tpu.memory_space<vmem>>, %arg5: memref<1x32xf32, #tpu.memory_space<vmem>>, %arg6: memref<32x32xf32, #tpu.memory_space<vmem>>, %arg7: memref<1x32xf32, #tpu.memory_space<vmem>>, %arg8: memref<32x1xf32, #tpu.memory_space<vmem>>, %arg9: memref<1x1xf32, #tpu.memory_space<vmem>>, %arg10: memref<8x1xf32, #tpu.memory_space<vmem>>) attributes {dimension_semantics = [#tpu.dimension_semantics<parallel>], iteration_bounds = array<i64: 1>, scalar_prefetch = 0 : i64, scratch_operands = 0 : i64, tpu.core_type = #tpu.core_type<tc>, window_params = [{transform_indices = @transform_0, window_bounds = array<i64: 8, 32>}, {transform_indices = @transform_1, window_bounds = array<i64: 8, 4>}, {pipeline_mode = #tpu.pipeline_mode<synchronous>, transform_indices = @transform_2, window_bounds = array<i64: 32, 32>}, {pipeline_mode = #tpu.pipeline_mode<synchronous>, transform_indices = @transform_3, window_bounds = array<i64: 4, 32>}, {pipeline_mode = #tpu.pipeline_mode<synchronous>, transform_indices = @transform_4, window_bounds = array<i64: 1, 32>}, {pipeline_mode = #tpu.pipeline_mode<synchronous>, transform_indices = @transform_5, window_bounds = array<i64: 32, 32>}, {pipeline_mode = #tpu.pipeline_mode<synchronous>, transform_indices = @transform_6, window_bounds = array<i64: 1, 32>}, {pipeline_mode = #tpu.pipeline_mode<synchronous>, transform_indices = @transform_7, window_bounds = array<i64: 32, 1>}, {pipeline_mode = #tpu.pipeline_mode<synchronous>, transform_indices = @transform_8, window_bounds = array<i64: 1, 1>}, {transform_indices = @transform_9, window_bounds = array<i64: 8, 1>}]} {
    %c0 = arith.constant 0 : index
    %c0_0 = arith.constant 0 : index
    %0 = vector.load %arg1[%c0, %c0_0] : memref<8x32xf32, #tpu.memory_space<vmem>>, vector<8x32xf32>
    %c0_1 = arith.constant 0 : index
    %c0_2 = arith.constant 0 : index
    %1 = vector.load %arg3[%c0_1, %c0_2] : memref<32x32xf32, #tpu.memory_space<vmem>>, vector<32x32xf32>
    %cst = arith.constant dense<0.000000e+00> : vector<8x32xf32>
    %2 = tpu.matmul %0, %1, %cst {dimension_numbers = #tpu.dot_dimension_numbers<[1], [0], [0], [1], [0, 0, 1, 1], [], []>} : vector<8x32xf32>, vector<32x32xf32>, vector<8x32xf32> -> vector<8x32xf32>
    %c0_3 = arith.constant 0 : index
    %c0_4 = arith.constant 0 : index
    %3 = vector.load %arg2[%c0_3, %c0_4] : memref<8x4xf32, #tpu.memory_space<vmem>>, vector<8x4xf32>
    %c0_5 = arith.constant 0 : index
    %c0_6 = arith.constant 0 : index
    %4 = vector.load %arg4[%c0_5, %c0_6] : memref<4x32xf32, #tpu.memory_space<vmem>>, vector<4x32xf32>
    %cst_7 = arith.constant dense<0.000000e+00> : vector<8x32xf32>
    %5 = tpu.matmul %3, %4, %cst_7 {dimension_numbers = #tpu.dot_dimension_numbers<[1], [0], [0], [1], [0, 0, 1, 1], [], []>} : vector<8x4xf32>, vector<4x32xf32>, vector<8x32xf32> -> vector<8x32xf32>
    %6 = arith.addf %2, %5 : vector<8x32xf32>
    %c0_8 = arith.constant 0 : index
    %c0_9 = arith.constant 0 : index
    %7 = vector.load %arg5[%c0_8, %c0_9] : memref<1x32xf32, #tpu.memory_space<vmem>>, vector<1x32xf32>
    %8 = vector.broadcast %7 : vector<1x32xf32> to vector<8x32xf32>
    %9 = arith.addf %6, %8 : vector<8x32xf32>
    %cst_10 = arith.constant 0.000000e+00 : f32
    %10 = vector.broadcast %cst_10 : f32 to vector<8x32xf32>
    %11 = arith.maximumf %9, %10 : vector<8x32xf32>
    %c0_11 = arith.constant 0 : index
    %c0_12 = arith.constant 0 : index
    %12 = vector.load %arg6[%c0_11, %c0_12] : memref<32x32xf32, #tpu.memory_space<vmem>>, vector<32x32xf32>
    %cst_13 = arith.constant dense<0.000000e+00> : vector<8x32xf32>
    %13 = tpu.matmul %11, %12, %cst_13 {dimension_numbers = #tpu.dot_dimension_numbers<[1], [0], [0], [1], [0, 0, 1, 1], [], []>} : vector<8x32xf32>, vector<32x32xf32>, vector<8x32xf32> -> vector<8x32xf32>
    %c0_14 = arith.constant 0 : index
    %c0_15 = arith.constant 0 : index
    %14 = vector.load %arg7[%c0_14, %c0_15] : memref<1x32xf32, #tpu.memory_space<vmem>>, vector<1x32xf32>
    %15 = vector.broadcast %14 : vector<1x32xf32> to vector<8x32xf32>
    %16 = arith.addf %13, %15 : vector<8x32xf32>
    %cst_16 = arith.constant 0.000000e+00 : f32
    %17 = vector.broadcast %cst_16 : f32 to vector<8x32xf32>
    %18 = arith.maximumf %16, %17 : vector<8x32xf32>
    %c0_17 = arith.constant 0 : index
    %c0_18 = arith.constant 0 : index
    %19 = vector.load %arg8[%c0_17, %c0_18] : memref<32x1xf32, #tpu.memory_space<vmem>>, vector<32x1xf32>
    %cst_19 = arith.constant dense<0.000000e+00> : vector<8x1xf32>
    %20 = tpu.matmul %18, %19, %cst_19 {dimension_numbers = #tpu.dot_dimension_numbers<[1], [0], [0], [1], [0, 0, 1, 1], [], []>} : vector<8x32xf32>, vector<32x1xf32>, vector<8x1xf32> -> vector<8x1xf32>
    %c0_20 = arith.constant 0 : index
    %c0_21 = arith.constant 0 : index
    %21 = vector.load %arg9[%c0_20, %c0_21] : memref<1x1xf32, #tpu.memory_space<vmem>>, vector<1x1xf32>
    %22 = vector.broadcast %21 : vector<1x1xf32> to vector<8x1xf32>
    %23 = arith.addf %20, %22 : vector<8x1xf32>
    %c0_22 = arith.constant 0 : index
    %c0_23 = arith.constant 0 : index
    %24 = vector.load %arg10[%c0_22, %c0_23] : memref<8x1xf32, #tpu.memory_space<vmem>>, vector<8x1xf32>
    tpu.vector_store %arg10[%c0_22, %c0_23], %23 {strides = array<i32>} : memref<8x1xf32, #tpu.memory_space<vmem>>, vector<8x1xf32>,
    return
  }
  func.func @transform_0(%arg0: i32) -> (i32, i32) {
    %c0_i32 = arith.constant 0 : i32
    %c0_i32_0 = arith.constant 0 : i32
    return %arg0, %c0_i32 : i32, i32
  }
  func.func @transform_1(%arg0: i32) -> (i32, i32) {
    %c0_i32 = arith.constant 0 : i32
    %c0_i32_0 = arith.constant 0 : i32
    return %arg0, %c0_i32 : i32, i32
  }
  func.func @transform_2(%arg0: i32) -> (i32, i32) {
    %c0_i32 = arith.constant 0 : i32
    %c0_i32_0 = arith.constant 0 : i32
    %c0_i32_1 = arith.constant 0 : i32
    return %c0_i32, %c0_i32_0 : i32, i32
  }
  func.func @transform_3(%arg0: i32) -> (i32, i32) {
    %c0_i32 = arith.constant 0 : i32
    %c0_i32_0 = arith.constant 0 : i32
    %c0_i32_1 = arith.constant 0 : i32
    return %c0_i32, %c0_i32_0 : i32, i32
  }
  func.func @transform_4(%arg0: i32) -> (i32, i32) {
    %c0_i32 = arith.constant 0 : i32
    %c0_i32_0 = arith.constant 0 : i32
    %c0_i32_1 = arith.constant 0 : i32
    return %c0_i32, %c0_i32_0 : i32, i32
  }
  func.func @transform_5(%arg0: i32) -> (i32, i32) {
    %c0_i32 = arith.constant 0 : i32
    %c0_i32_0 = arith.constant 0 : i32
    %c0_i32_1 = arith.constant 0 : i32
    return %c0_i32, %c0_i32_0 : i32, i32
  }
  func.func @transform_6(%arg0: i32) -> (i32, i32) {
    %c0_i32 = arith.constant 0 : i32
    %c0_i32_0 = arith.constant 0 : i32
    %c0_i32_1 = arith.constant 0 : i32
    return %c0_i32, %c0_i32_0 : i32, i32
  }
  func.func @transform_7(%arg0: i32) -> (i32, i32) {
    %c0_i32 = arith.constant 0 : i32
    %c0_i32_0 = arith.constant 0 : i32
    %c0_i32_1 = arith.constant 0 : i32
    return %c0_i32, %c0_i32_0 : i32, i32
  }
  func.func @transform_8(%arg0: i32) -> (i32, i32) {
    %c0_i32 = arith.constant 0 : i32
    %c0_i32_0 = arith.constant 0 : i32
    %c0_i32_1 = arith.constant 0 : i32
    return %c0_i32, %c0_i32_0 : i32, i32
  }
  func.func @transform_9(%arg0: i32) -> (i32, i32) {
    %c0_i32 = arith.constant 0 : i32
    %c0_i32_0 = arith.constant 0 : i32
    return %arg0, %c0_i32 : i32, i32
  }
}

</mosaic_0001>

<llo_original>
// kernel: qfunction_forward.1
$region0: #{qfunction_forward.1}
  #allocation0 [shape = 'u32[]', space=smem, size = 0x4, offset = 0x4, fixed_abs, tag = 'smem constant byte address 0x4 - core index']
  #allocation1 [shape = 'u32[72,128]{1,0:T(1,128)}', space=vmem, size = 0x9000, scoped, tag = 'internal scratch']
  #allocation2 [shape = 'f32[1,1]{1,0:T(1,128)S(1)}', space=vmem, size = 0x200, scoped, tag = 'scoped memory for qfunction_forward.1']
  %s0 = inlined_call_operand.vmem [shape: f32[8,32], index: 0, kind: input, shape index: {}]
  %s1 = inlined_call_operand.vmem [shape: f32[8,4], index: 1, kind: input, shape index: {}]
  %s2 = inlined_call_operand.vmem [shape: f32[32,32], index: 2, kind: input, shape index: {}]
  %s3 = inlined_call_operand.vmem [shape: f32[4,32], index: 3, kind: input, shape index: {}]
  %s4 = inlined_call_operand.vmem [shape: f32[1,32], index: 4, kind: input, shape index: {}]
  %s5 = inlined_call_operand.hbm [shape: f32[32,32], index: 5, kind: input, shape index: {}]
  %s6 = inlined_call_operand.vmem [shape: f32[1,32], index: 6, kind: input, shape index: {}]
  %s7 = inlined_call_operand.vmem [shape: f32[32,1], index: 7, kind: input, shape index: {}]
  %s8 = inlined_call_operand.<no memory space> [shape: f32[1,1], index: 8, kind: input, shape index: {}]
  %s9 = inlined_call_operand.vmem [shape: f32[8,1], index: 9, kind: output, shape index: {}]
  %s10 = sld [smem:[#allocation0]]
  $region50: #{qfunction_forward.1} parent=0
    _
  %s12 = ssub.s32 1, %s10
  %s13 = scalar_select 0, %s12, %s10
  %v14 = vstv %s8
  %15 = vst [vmem:[#allocation2] sm:$0x1] %v14
  $region1: #{qfunction_forward.1} parent=0
    #allocation3 [shape = 'u8[16384]{0}', space=vmem, size = 0x4000, scoped, tag = 'input window, operand 5, single buffered']
    #allocation4 [shape = 's32[1]{0}', space=sflag, size = 0x4, scoped, tag = 'scoped memory for qfunction_forward.1']
    %16 = vsyncpa [#allocation4], 0
    // Predicated region
    $region2: #{qfunction_forward.1} parent=1 // pred_check
      _
    $region3: #{qfunction_forward.1} parent=1 // pred_check_branch
      %18 = sbr.rel (0) target = $region5
    $region4: #{qfunction_forward.1} parent=1 // pred_region
      _
    $region5: #{qfunction_forward.1} parent=1 // pred_fallthru
      _
    // Predicated region
    $region6: #{qfunction_forward.1} parent=1 // pred_check
      _
    $region7: #{qfunction_forward.1} parent=1 // pred_check_branch
      %20 = sbr.rel (0) target = $region9
    $region8: #{qfunction_forward.1} parent=1 // pred_region
      _
    $region9: #{qfunction_forward.1} parent=1 // pred_fallthru
      _
    // Predicated region
    $region10: #{qfunction_forward.1} parent=1 // pred_check
      _
    $region11: #{qfunction_forward.1} parent=1 // pred_check_branch
      %22 = sbr.rel (0) target = $region13
    $region12: #{qfunction_forward.1} parent=1 // pred_region
      _
    $region13: #{qfunction_forward.1} parent=1 // pred_fallthru
      _
    // Predicated region
    $region14: #{qfunction_forward.1} parent=1 // pred_check
      _
    $region15: #{qfunction_forward.1} parent=1 // pred_check_branch
      %24 = sbr.rel (0) target = $region17
    $region16: #{qfunction_forward.1} parent=1 // pred_region
      _
    $region17: #{qfunction_forward.1} parent=1 // pred_fallthru
      _
    // Predicated region
    $region18: #{qfunction_forward.1} parent=1 // pred_check
      _
    $region19: #{qfunction_forward.1} parent=1 // pred_check_branch
      %26 = sbr.rel (0) target = $region21
    $region20: #{qfunction_forward.1} parent=1 // pred_region
      _
    $region21: #{qfunction_forward.1} parent=1 // pred_fallthru
      _
    // Predicated region
    $region22: #{qfunction_forward.1} parent=1 // pred_check
      _
    $region23: #{qfunction_forward.1} parent=1 // pred_check_branch
      %28 = sbr.rel (0) target = $region25
    $region24: #{qfunction_forward.1} parent=1 // pred_region
      %30 = vsyncadd [#allocation4], 0
      %s31 = sshll.u32 %s5, 4
      %s32 = int_to_ptr.hbm [resolvable:$true] %s31
      %s33 = sshll.u32 [#allocation3], 4
      %s34 = int_to_ptr.vmem [resolvable:$true] %s33
      %39 = dma.hbm_to_vmem [thread:$0]  %s32, 512, %s34, [#allocation4], 128, 128, 8
    $region25: #{qfunction_forward.1} parent=1 // pred_fallthru
      _
    // Predicated region
    $region26: #{qfunction_forward.1} parent=1 // pred_check
      _
    $region27: #{qfunction_forward.1} parent=1 // pred_check_branch
      %41 = sbr.rel (0) target = $region29
    $region28: #{qfunction_forward.1} parent=1 // pred_region
      _
    $region29: #{qfunction_forward.1} parent=1 // pred_fallthru
      _
    // Predicated region
    $region30: #{qfunction_forward.1} parent=1 // pred_check
      _
    $region31: #{qfunction_forward.1} parent=1 // pred_check_branch
      %43 = sbr.rel (0) target = $region33
    $region32: #{qfunction_forward.1} parent=1 // pred_region
      _
    $region33: #{qfunction_forward.1} parent=1 // pred_fallthru
      _
    // Predicated region
    $region34: #{qfunction_forward.1} parent=1 // pred_check
      _
    $region35: #{qfunction_forward.1} parent=1 // pred_check_branch
      %45 = sbr.rel (0) target = $region37
    $region36: #{qfunction_forward.1} parent=1 // pred_region
      _
    $region37: #{qfunction_forward.1} parent=1 // pred_fallthru
      _
    // Predicated region
    $region38: #{qfunction_forward.1} parent=1 // pred_check
      _
    $region39: #{qfunction_forward.1} parent=1 // pred_check_branch
      %47 = sbr.rel (0) target = $region41
    $region40: #{qfunction_forward.1} parent=1 // pred_region
      %49 = dma.done [#allocation4], 512
    $region41: #{qfunction_forward.1} parent=1 // pred_fallthru
      _
    %v50 = vld [vmem:[%s0] sm:$0xff]
    %v51 = vld [vmem:[%s2] sm:$0xff]
    %v52 = vld [vmem:[%s2 + $0x8] sm:$0xff]
    %v53 = vld [vmem:[%s2 + $0x10] sm:$0xff]
    %v54 = vld [vmem:[%s2 + $0x18] sm:$0xff]
    %v55 = vld [vmem:[%s1] sm:$0xff]
    %v56 = vld [vmem:[%s3] sm:$0xf]
    %vm57 = vcmask 31744
    %v59 = vsel %vm57, %v55, 0
    %vm61 = vcmask 1043456
    %v63 = vsel %vm61, %v56, 0
    %65 = vmatpush.msra.mxu0 0.0
    %66 = vmatpush.msra.mxu0 0.0
    %67 = vmatpush.msra.mxu0 0.0
    %68 = vmatpush.msra.mxu0 0.0
    %69 = vmatpush.msra.mxu0 0.0
    %70 = vmatpush.msra.mxu0 0.0
    %71 = vmatpush.msra.mxu0 0.0
    %72 = vmatpush.msra.mxu0 0.0
    %73 = vmatpush.msra.mxu0 0.0
    %74 = vmatpush.msra.mxu0 0.0
    %75 = vmatpush.msra.mxu0 0.0
    %76 = vmatpush.msra.mxu0 0.0
    %77 = vmatpush.msra.mxu0 0.0
    %78 = vmatpush.msra.mxu0 0.0
    %79 = vmatpush.msra.mxu0 0.0
    %80 = vmatpush.msra.mxu0 %v63
    %81 = vmatmul.f32.gmra.mxu0 %v59
    %v82 = vpop.f32.mrf.mxu0
    %v83 = vadd.f32 0.0, %v82
    %84 = vdwg.mxu0
    %vm85 = vcmask 261120
    %v87 = vsel %vm85, %v50, 0
    %89 = vmatpush.msra.mxu0 0.0
    %90 = vmatpush.msra.mxu0 0.0
    %91 = vmatpush.msra.mxu0 0.0
    %92 = vmatpush.msra.mxu0 0.0
    %93 = vmatpush.msra.mxu0 0.0
    %94 = vmatpush.msra.mxu0 0.0
    %95 = vmatpush.msra.mxu0 0.0
    %96 = vmatpush.msra.mxu0 0.0
    %97 = vmatpush.msra.mxu0 0.0
    %98 = vmatpush.msra.mxu0 0.0
    %99 = vmatpush.msra.mxu0 0.0
    %100 = vmatpush.msra.mxu0 0.0
    %101 = vmatpush.msra.mxu0 %v54
    %102 = vmatpush.msra.mxu0 %v53
    %103 = vmatpush.msra.mxu0 %v52
    %104 = vmatpush.msra.mxu0 %v51
    %105 = vmatmul.f32.gmra.mxu0 %v87
    %v106 = vpop.f32.mrf.mxu0
    %v107 = vadd.f32 %v83, %v106
    %108 = vdwg.mxu0
    %v109 = vld [vmem:[%s4] sm:$0x1]
    %v111 = vperm.slane %v109, 0
    %v113 = vadd.f32 %v107, %v111
    %v114 = vmax.f32 %v113, 0.0
    %v115 = vld [vmem:[#allocation3] sm:$0xff]
    %v116 = vld [vmem:[#allocation3 + $0x8] sm:$0xff]
    %v117 = vld [vmem:[#allocation3 + $0x10] sm:$0xff]
    %v118 = vld [vmem:[#allocation3 + $0x18] sm:$0xff]
    %v119 = vld [vmem:[%s6] sm:$0x1]
    %v121 = vperm.slane %v119, 0
    %v124 = vsel %vm85, %v114, 0
    %126 = vmatpush.msra.mxu0 0.0
    %127 = vmatpush.msra.mxu0 0.0
    %128 = vmatpush.msra.mxu0 0.0
    %129 = vmatpush.msra.mxu0 0.0
    %130 = vmatpush.msra.mxu0 0.0
    %131 = vmatpush.msra.mxu0 0.0
    %132 = vmatpush.msra.mxu0 0.0
    %133 = vmatpush.msra.mxu0 0.0
    %134 = vmatpush.msra.mxu0 0.0
    %135 = vmatpush.msra.mxu0 0.0
    %136 = vmatpush.msra.mxu0 0.0
    %137 = vmatpush.msra.mxu0 0.0
    %138 = vmatpush.msra.mxu0 %v118
    %139 = vmatpush.msra.mxu0 %v117
    %140 = vmatpush.msra.mxu0 %v116
    %141 = vmatpush.msra.mxu0 %v115
    %142 = vmatmul.f32.gmra.mxu0 %v124
    %v143 = vpop.f32.mrf.mxu0
    %v144 = vadd.f32 %v121, %v143
    %145 = vdwg.mxu0
    %v146 = vmax.f32 %v144, 0.0
    %v147 = vld [vmem:[%s7] sm:$0xff]
    %v148 = vld [vmem:[%s7 + $0x8] sm:$0xff]
    %v149 = vld [vmem:[%s7 + $0x10] sm:$0xff]
    %v150 = vld [vmem:[%s7 + $0x18] sm:$0xff]
    %v151 = vld [vmem:[#allocation2] sm:$0x1]
    %v153 = vperm.slane %v151, 0
    %v156 = vsel %vm85, %v146, 0
    %158 = vmatpush.msra.mxu0 0.0
    %159 = vmatpush.msra.mxu0 0.0
    %160 = vmatpush.msra.mxu0 0.0
    %161 = vmatpush.msra.mxu0 0.0
    %162 = vmatpush.msra.mxu0 0.0
    %163 = vmatpush.msra.mxu0 0.0
    %164 = vmatpush.msra.mxu0 0.0
    %165 = vmatpush.msra.mxu0 0.0
    %166 = vmatpush.msra.mxu0 0.0
    %167 = vmatpush.msra.mxu0 0.0
    %168 = vmatpush.msra.mxu0 0.0
    %169 = vmatpush.msra.mxu0 0.0
    %170 = vmatpush.msra.mxu0 %v150
    %171 = vmatpush.msra.mxu0 %v149
    %172 = vmatpush.msra.mxu0 %v148
    %173 = vmatpush.msra.mxu0 %v147
    %174 = vmatmul.f32.gmra.mxu0 %v156
    %v175 = vpop.f32.mrf.mxu0
    %v176 = vadd.f32 %v153, %v175
    %177 = vdwg.mxu0
    %vm178 = vcmask 7168
    %179 = vst.msk [vmem:[%s9] sm:$0xff] %vm178, %v176
    // Predicated region
    $region42: #{qfunction_forward.1} parent=1 // pred_check
      _
    $region43: #{qfunction_forward.1} parent=1 // pred_check_branch
      %181 = sbr.rel (0) target = $region45
    $region44: #{qfunction_forward.1} parent=1 // pred_region
      _
    $region45: #{qfunction_forward.1} parent=1 // pred_fallthru
      _
    // Predicated region
    $region46: #{qfunction_forward.1} parent=1 // pred_check
      _
    $region47: #{qfunction_forward.1} parent=1 // pred_check_branch
      %183 = sbr.rel (0) target = $region49
    $region48: #{qfunction_forward.1} parent=1 // pred_region
      _
    $region49: #{qfunction_forward.1} parent=1 // pred_fallthru
      _
    %184 = vsyncpa [#allocation4], 1

</llo_original>
